<compile_context>
chip_gen: v5e
topology: v5e:2x2
jax: 0.10.0
libtpu: 0.0.40
codegen_flags: <defaults>
</compile_context>

<pallas_src>
import functools

import jax
import jax.numpy as jnp
from jax import lax
from jax.experimental import pallas as pl
from jax.experimental.pallas import tpu as pltpu


def _round_up(n, m):
    return ((n + m - 1) // m) * m


def _value_net_kernel(xT_ref, w1_ref, b1_ref, w2_ref, b2_ref, o_ref, *, n_chunks, chunk):
    H = w1_ref.shape[0]
    w1 = w1_ref[...]                                     # [H, S]
    b2 = b2_ref[0]                                       # scalar, read from SMEM
    # Hoisted lane-broadcasts: JAX does not CSE broadcast_in_dim inside the loop.
    b1_b = jnp.broadcast_to(b1_ref[...], (H, chunk))     # [H, C]
    w2_b = jnp.broadcast_to(w2_ref[...], (H, chunk))     # [H, C]

    def body(c, carry):
        start = pl.multiple_of(c * chunk, chunk)
        x_c = xT_ref[:, pl.ds(start, chunk)]             # [S, C], batch on the lane axis
        # fc1: canonical contraction (w1 last dim vs xT first dim) -> no transpose.
        h = lax.dot_general(
            w1, x_c,
            dimension_numbers=(((1,), (0,)), ((), ())),
            preferred_element_type=jnp.float32,
        )                                                # [H, C]
        h = jnp.maximum(h + b1_b, 0.0)
        # fc2 (H -> 1): VPU elementwise multiply + XLU sublane reduce -> [1, C].
        out = jnp.sum(h * w2_b, axis=0, keepdims=True) + b2
        o_ref[:, pl.ds(start, chunk)] = out.astype(o_ref.dtype)   # lane-dense full-width store
        return carry

    # Short chunk counts are unrolled for LLO scheduling visibility.
    lax.fori_loop(0, n_chunks, body, 0, unroll=(n_chunks <= 8))


@functools.partial(
    jax.jit, static_argnames=("lane_chunk", "max_tile_lanes", "min_grid_steps")
)
def value_network_forward(x, w1, b1, w2, b2, *,
                          lane_chunk=256, max_tile_lanes=65536, min_grid_steps=1):
    """Forward pass of ValueNetwork: relu(x @ W1^T + b1) @ W2^T + b2.

    x : [B, S]            input states
    w1: [H, S], b1: [H]   fc1 params (PyTorch nn.Linear layout)
    w2: [1, H], b2: [1]   fc2 params
    returns [B, 1]

    min_grid_steps=2 gives exactly one grid step per TensorCore on v7x.
    """
    B, S = x.shape
    H = w1.shape[0]

    # Lane-dense layout: batch on the lane axis.  One cheap [B,S]->[S,B] transpose here
    # removes the 32x lane-padding / narrow DMAs of [TB, 4] tiles inside the kernel.
    xT = x.T                                             # [S, B]

    # Fewest grid steps that fit the per-step VMEM budget (x + out tiles, double
    # buffered, ~128 B per lane => ~8 MiB at 64K lanes, inside every chip's scoped default).
    Bp0 = _round_up(B, lane_chunk)
    n_steps = max(min_grid_steps, pl.cdiv(Bp0, max_tile_lanes))
    TB = _round_up(pl.cdiv(Bp0, n_steps), lane_chunk)
    Bp = TB * n_steps

    if Bp != B:
        # Padding the [S, B] layout copies only S*Bp*4 bytes (S=4) -- negligible.
        xT = jnp.pad(xT, ((0, 0), (0, Bp - B)))

    # Row-major-order-preserving reshapes only (no transpose HLOs on params).
    b1_col = b1.reshape(H, 1)      # [H, 1]
    w2_col = w2.reshape(H, 1)      # [H, 1] (same linear order as [1, H])
    b2_s = b2.reshape(1)           # scalar -> SMEM

    kernel = functools.partial(
        _value_net_kernel, n_chunks=TB // lane_chunk, chunk=lane_chunk
    )

    out = pl.pallas_call(
        kernel,
        out_shape=jax.ShapeDtypeStruct((1, Bp), x.dtype),
        grid=(n_steps,),
        in_specs=[
            pl.BlockSpec((S, TB), lambda i: (0, i)),               # xT: lane-dense batch tiles
            pl.BlockSpec((H, S), lambda i: (0, 0)),                # W1: VMEM resident
            pl.BlockSpec((H, 1), lambda i: (0, 0)),                # b1: VMEM resident
            pl.BlockSpec((H, 1), lambda i: (0, 0)),                # w2: VMEM resident
            pl.BlockSpec(memory_space=pltpu.MemorySpace.SMEM),     # b2: scalar in SMEM
        ],
        out_specs=pl.BlockSpec((1, TB), lambda i: (0, i)),         # lane-dense output tiles
        compiler_params=pltpu.CompilerParams(
            dimension_semantics=("parallel",),                     # v7x TCs split the steps
        ),
    )(xT, w1, b1_col, w2_col, b2_s)

    # [1, Bp] -> [B, 1]: tiny slice + reshape, no transpose op.
    return out[0, :B].reshape(B, 1)


def init_params(key, state_size, fc1_units):
    """Deterministic init mimicking PyTorch nn.Linear default (uniform +-1/sqrt(fan_in))."""
    k1, k2, k3, k4 = jax.random.split(key, 4)
    lim1 = 1.0 / jnp.sqrt(state_size)
    lim2 = 1.0 / jnp.sqrt(fc1_units)
    w1 = jax.random.uniform(k1, (fc1_units, state_size), jnp.float32, -lim1, lim1)
    b1 = jax.random.uniform(k2, (fc1_units,), jnp.float32, -lim1, lim1)
    w2 = jax.random.uniform(k3, (1, fc1_units), jnp.float32, -lim2, lim2)
    b2 = jax.random.uniform(k4, (1,), jnp.float32, -lim2, lim2)
    return w1, b1, w2, b2


if __name__ == "__main__":
    key = jax.random.PRNGKey(0)
    state_size, fc1_units = 4, 128  # CartPole state_size = 4

    kp, kx1, kx2, kx3 = jax.random.split(key, 4)
    w1, b1, w2, b2 = init_params(kp, state_size, fc1_units)

    def ref_fn(x):
        return jnp.maximum(x @ w1.T + b1, 0.0) @ w2.T + b2

    # Tiny batch: single grid step, single 256-lane chunk, padded then sliced back.
    x1 = jax.random.normal(kx1, (2, state_size), jnp.float32)
    out1 = jax.block_until_ready(value_network_forward(x1, w1, b1, w2, b2))
    assert out1.shape == (2, 1)
    assert jnp.allclose(out1, ref_fn(x1), atol=1e-5, rtol=1e-5), "mismatch (tiny batch)"

    # Single grid step, multiple inner lane chunks: B=300 -> Bp=512, 2 chunks.
    x2 = jax.random.normal(kx2, (300, state_size), jnp.float32)
    out2 = jax.block_until_ready(value_network_forward(x2, w1, b1, w2, b2))
    assert out2.shape == (300, 1)
    assert jnp.allclose(out2, ref_fn(x2), atol=1e-5, rtol=1e-5), "mismatch (multi-chunk)"

    # Forced multi-step grid path (emulates the v7x two-TensorCore split).
    x3 = jax.random.normal(kx3, (600, state_size), jnp.float32)
    out3 = jax.block_until_ready(
        value_network_forward(x3, w1, b1, w2, b2, max_tile_lanes=256))
    assert out3.shape == (600, 1)
    assert jnp.allclose(out3, ref_fn(x3), atol=1e-5, rtol=1e-5), "mismatch (gridded)"

    print("KERNEL_OK")
</pallas_src>

<mosaic_0001>
module attributes {stable_mosaic.version = 11 : i64} {
  func.func @_value_net_kernel(%arg0: i32, %arg1: memref<4x256xf32, #tpu.memory_space<vmem>>, %arg2: memref<128x4xf32, #tpu.memory_space<vmem>>, %arg3: memref<128x1xf32, #tpu.memory_space<vmem>>, %arg4: memref<128x1xf32, #tpu.memory_space<vmem>>, %arg5: memref<1xf32, #tpu.memory_space<smem>>, %arg6: memref<1x256xf32, #tpu.memory_space<vmem>>) attributes {dimension_semantics = [#tpu.dimension_semantics<parallel>], iteration_bounds = array<i64: 1>, scalar_prefetch = 0 : i64, scratch_operands = 0 : i64, tpu.core_type = #tpu.core_type<tc>, window_params = [{transform_indices = @transform_0, window_bounds = array<i64: 4, 256>}, {pipeline_mode = #tpu.pipeline_mode<synchronous>, transform_indices = @transform_1, window_bounds = array<i64: 128, 4>}, {pipeline_mode = #tpu.pipeline_mode<synchronous>, transform_indices = @transform_2, window_bounds = array<i64: 128, 1>}, {pipeline_mode = #tpu.pipeline_mode<synchronous>, transform_indices = @transform_3, window_bounds = array<i64: 128, 1>}, {transform_indices = @transform_4, window_bounds = array<i64: 1>}, {transform_indices = @transform_5, window_bounds = array<i64: 1, 256>}]} {
    %c0 = arith.constant 0 : index
    %c0_0 = arith.constant 0 : index
    %0 = vector.load %arg2[%c0, %c0_0] : memref<128x4xf32, #tpu.memory_space<vmem>>, vector<128x4xf32>
    %c0_1 = arith.constant 0 : index
    %1 = memref.load %arg5[%c0_1] : memref<1xf32, #tpu.memory_space<smem>>
    %c0_2 = arith.constant 0 : index
    %c0_3 = arith.constant 0 : index
    %2 = vector.load %arg3[%c0_2, %c0_3] : memref<128x1xf32, #tpu.memory_space<vmem>>, vector<128x1xf32>
    %3 = vector.shape_cast %2 : vector<128x1xf32> to vector<128x1xf32>
    %4 = vector.broadcast %3 : vector<128x1xf32> to vector<128x256xf32>
    %c0_4 = arith.constant 0 : index
    %c0_5 = arith.constant 0 : index
    %5 = vector.load %arg4[%c0_4, %c0_5] : memref<128x1xf32, #tpu.memory_space<vmem>>, vector<128x1xf32>
    %6 = vector.shape_cast %5 : vector<128x1xf32> to vector<128x1xf32>
    %7 = vector.broadcast %6 : vector<128x1xf32> to vector<128x256xf32>
    %c0_i32 = arith.constant 0 : i32
    %c256_i32 = arith.constant 256 : i32
    %8 = arith.muli %c0_i32, %c256_i32 : i32
    %9 = tpu.assume_multiple %8, 256 : i32
    %c0_6 = arith.constant 0 : index
    %10 = arith.index_cast %9 : i32 to index
    %11 = vector.load %arg1[%c0_6, %10] : memref<4x256xf32, #tpu.memory_space<vmem>>, vector<4x256xf32>
    %cst = arith.constant dense<0.000000e+00> : vector<128x256xf32>
    %12 = tpu.matmul %0, %11, %cst {dimension_numbers = #tpu.dot_dimension_numbers<[1], [0], [0], [1], [0, 0, 1, 1], [], []>} : vector<128x4xf32>, vector<4x256xf32>, vector<128x256xf32> -> vector<128x256xf32>
    %13 = arith.addf %12, %4 : vector<128x256xf32>
    %cst_7 = arith.constant 0.000000e+00 : f32
    %14 = vector.broadcast %cst_7 : f32 to vector<128x256xf32>
    %15 = arith.maximumf %13, %14 : vector<128x256xf32>
    %16 = arith.mulf %15, %7 : vector<128x256xf32>
    %cst_8 = arith.constant dense<0.000000e+00> : vector<256xf32>
    %17 = vector.multi_reduction <add>, %16, %cst_8 [0] : vector<128x256xf32> to vector<256xf32>
    %18 = vector.shape_cast %17 : vector<256xf32> to vector<1x256xf32>
    %19 = vector.broadcast %1 : f32 to vector<1x256xf32>
    %20 = arith.addf %18, %19 : vector<1x256xf32>
    %c0_9 = arith.constant 0 : index
    %21 = arith.index_cast %9 : i32 to index
    %22 = vector.load %arg6[%c0_9, %21] : memref<1x256xf32, #tpu.memory_space<vmem>>, vector<1x256xf32>
    tpu.vector_store %arg6[%c0_9, %21], %20 {strides = array<i32>} : memref<1x256xf32, #tpu.memory_space<vmem>>, vector<1x256xf32>,
    %c1_i32 = arith.constant 1 : i32
    return
  }
  func.func @transform_0(%arg0: i32) -> (i32, i32) {
    %c0_i32 = arith.constant 0 : i32
    %c0_i32_0 = arith.constant 0 : i32
    return %c0_i32, %arg0 : i32, i32
  }
  func.func @transform_1(%arg0: i32) -> (i32, i32) {
    %c0_i32 = arith.constant 0 : i32
    %c0_i32_0 = arith.constant 0 : i32
    %c0_i32_1 = arith.constant 0 : i32
    return %c0_i32, %c0_i32_0 : i32, i32
  }
  func.func @transform_2(%arg0: i32) -> (i32, i32) {
    %c0_i32 = arith.constant 0 : i32
    %c0_i32_0 = arith.constant 0 : i32
    %c0_i32_1 = arith.constant 0 : i32
    return %c0_i32, %c0_i32_0 : i32, i32
  }
  func.func @transform_3(%arg0: i32) -> (i32, i32) {
    %c0_i32 = arith.constant 0 : i32
    %c0_i32_0 = arith.constant 0 : i32
    %c0_i32_1 = arith.constant 0 : i32
    return %c0_i32, %c0_i32_0 : i32, i32
  }
  func.func @transform_4(%arg0: i32) -> i32 {
    %c0_i32 = arith.constant 0 : i32
    %c0_i32_0 = arith.constant 0 : i32
    return %c0_i32 : i32
  }
  func.func @transform_5(%arg0: i32) -> (i32, i32) {
    %c0_i32 = arith.constant 0 : i32
    %c0_i32_0 = arith.constant 0 : i32
    return %c0_i32, %arg0 : i32, i32
  }
}

</mosaic_0001>

<llo_original>
// kernel: value_network_forward.1
$region0: #{value_network_forward.1}
  #allocation0 [shape = 'u32[]', space=smem, size = 0x4, offset = 0x4, fixed_abs, tag = 'smem constant byte address 0x4 - core index']
  #allocation1 [shape = 'u32[72,128]{1,0:T(1,128)}', space=vmem, size = 0x9000, scoped, tag = 'internal scratch']
  #allocation2 [shape = 'f32[1]{0:T(128)S(6)}', space=smem, size = 0x200, scoped, tag = 'scoped memory for value_network_forward.1']
  %s0 = inlined_call_operand.vmem [shape: f32[4,256], index: 0, kind: input, shape index: {}]
  %s1 = inlined_call_operand.vmem [shape: f32[128,4], index: 1, kind: input, shape index: {}]
  %s2 = inlined_call_operand.vmem [shape: f32[128,1], index: 2, kind: input, shape index: {}]
  %s3 = inlined_call_operand.vmem [shape: f32[128,1], index: 3, kind: input, shape index: {}]
  %s4 = inlined_call_operand.<no memory space> [shape: f32[1], index: 4, kind: input, shape index: {}]
  %s5 = inlined_call_operand.vmem [shape: f32[1,256], index: 5, kind: output, shape index: {}]
  %s6 = sld [smem:[#allocation0]]
  $region30: #{value_network_forward.1} parent=0
    _
  %s8 = ssub.s32 1, %s6
  %s9 = scalar_select 0, %s8, %s6
  %10 = sst [smem:[#allocation2]] %s4
  // Predicated region
  $region2: #{value_network_forward.1} parent=0 // pred_check
    _
  $region3: #{value_network_forward.1} parent=0 // pred_check_branch
    %12 = sbr.rel (0) target = $region5
  $region4: #{value_network_forward.1} parent=0 // pred_region
    _
  $region5: #{value_network_forward.1} parent=0 // pred_fallthru
    _
  // Predicated region
  $region6: #{value_network_forward.1} parent=0 // pred_check
    _
  $region7: #{value_network_forward.1} parent=0 // pred_check_branch
    %14 = sbr.rel (0) target = $region9
  $region8: #{value_network_forward.1} parent=0 // pred_region
    _
  $region9: #{value_network_forward.1} parent=0 // pred_fallthru
    _
  // Predicated region
  $region10: #{value_network_forward.1} parent=0 // pred_check
    _
  $region11: #{value_network_forward.1} parent=0 // pred_check_branch
    %16 = sbr.rel (0) target = $region13
  $region12: #{value_network_forward.1} parent=0 // pred_region
    _
  $region13: #{value_network_forward.1} parent=0 // pred_fallthru
    _
  // Predicated region
  $region14: #{value_network_forward.1} parent=0 // pred_check
    _
  $region15: #{value_network_forward.1} parent=0 // pred_check_branch
    %18 = sbr.rel (0) target = $region17
  $region16: #{value_network_forward.1} parent=0 // pred_region
    _
  $region17: #{value_network_forward.1} parent=0 // pred_fallthru
    _
  // Predicated region
  $region18: #{value_network_forward.1} parent=0 // pred_check
    _
  $region19: #{value_network_forward.1} parent=0 // pred_check_branch
    %20 = sbr.rel (0) target = $region21
  $region20: #{value_network_forward.1} parent=0 // pred_region
    _
  $region21: #{value_network_forward.1} parent=0 // pred_fallthru
    _
  %v21 = vld [vmem:[%s1] sm:$0xff]
  %v22 = vld [vmem:[%s1 + $0x8] sm:$0xff]
  %v23 = vld [vmem:[%s1 + $0x10] sm:$0xff]
  %v24 = vld [vmem:[%s1 + $0x18] sm:$0xff]
  %v25 = vld [vmem:[%s1 + $0x20] sm:$0xff]
  %v26 = vld [vmem:[%s1 + $0x28] sm:$0xff]
  %v27 = vld [vmem:[%s1 + $0x30] sm:$0xff]
  %v28 = vld [vmem:[%s1 + $0x38] sm:$0xff]
  %v29 = vld [vmem:[%s1 + $0x40] sm:$0xff]
  %v30 = vld [vmem:[%s1 + $0x48] sm:$0xff]
  %v31 = vld [vmem:[%s1 + $0x50] sm:$0xff]
  %v32 = vld [vmem:[%s1 + $0x58] sm:$0xff]
  %v33 = vld [vmem:[%s1 + $0x60] sm:$0xff]
  %v34 = vld [vmem:[%s1 + $0x68] sm:$0xff]
  %v35 = vld [vmem:[%s1 + $0x70] sm:$0xff]
  %v36 = vld [vmem:[%s1 + $0x78] sm:$0xff]
  %s37 = sld [smem:[#allocation2]]
  %v38 = vld [vmem:[%s2] sm:$0xff]
  %v39 = vld [vmem:[%s2 + $0x8] sm:$0xff]
  %v40 = vld [vmem:[%s2 + $0x10] sm:$0xff]
  %v41 = vld [vmem:[%s2 + $0x18] sm:$0xff]
  %v42 = vld [vmem:[%s2 + $0x20] sm:$0xff]
  %v43 = vld [vmem:[%s2 + $0x28] sm:$0xff]
  %v44 = vld [vmem:[%s2 + $0x30] sm:$0xff]
  %v45 = vld [vmem:[%s2 + $0x38] sm:$0xff]
  %v46 = vld [vmem:[%s2 + $0x40] sm:$0xff]
  %v47 = vld [vmem:[%s2 + $0x48] sm:$0xff]
  %v48 = vld [vmem:[%s2 + $0x50] sm:$0xff]
  %v49 = vld [vmem:[%s2 + $0x58] sm:$0xff]
  %v50 = vld [vmem:[%s2 + $0x60] sm:$0xff]
  %v51 = vld [vmem:[%s2 + $0x68] sm:$0xff]
  %v52 = vld [vmem:[%s2 + $0x70] sm:$0xff]
  %v53 = vld [vmem:[%s2 + $0x78] sm:$0xff]
  %55 = vset.pattern.permute.xlu0 0
  %56 = vperm.xlu0 %55, %v38
  %v57 = vpop.permute.xlu0 %56
  %60 = vset.pattern.permute.xlu0 0
  %61 = vperm.xlu0 %60, %v39
  %v62 = vpop.permute.xlu0 %61
  %65 = vset.pattern.permute.xlu0 0
  %66 = vperm.xlu0 %65, %v40
  %v67 = vpop.permute.xlu0 %66
  %70 = vset.pattern.permute.xlu0 0
  %71 = vperm.xlu0 %70, %v41
  %v72 = vpop.permute.xlu0 %71
  %75 = vset.pattern.permute.xlu0 0
  %76 = vperm.xlu0 %75, %v42
  %v77 = vpop.permute.xlu0 %76
  %80 = vset.pattern.permute.xlu0 0
  %81 = vperm.xlu0 %80, %v43
  %v82 = vpop.permute.xlu0 %81
  %85 = vset.pattern.permute.xlu0 0
  %86 = vperm.xlu0 %85, %v44
  %v87 = vpop.permute.xlu0 %86
  %90 = vset.pattern.permute.xlu0 0
  %91 = vperm.xlu0 %90, %v45
  %v92 = vpop.permute.xlu0 %91
  %95 = vset.pattern.permute.xlu0 0
  %96 = vperm.xlu0 %95, %v46
  %v97 = vpop.permute.xlu0 %96
  %100 = vset.pattern.permute.xlu0 0
  %101 = vperm.xlu0 %100, %v47
  %v102 = vpop.permute.xlu0 %101
  %105 = vset.pattern.permute.xlu0 0
  %106 = vperm.xlu0 %105, %v48
  %v107 = vpop.permute.xlu0 %106
  %110 = vset.pattern.permute.xlu0 0
  %111 = vperm.xlu0 %110, %v49
  %v112 = vpop.permute.xlu0 %111
  %115 = vset.pattern.permute.xlu0 0
  %116 = vperm.xlu0 %115, %v50
  %v117 = vpop.permute.xlu0 %116
  %120 = vset.pattern.permute.xlu0 0
  %121 = vperm.xlu0 %120, %v51
  %v122 = vpop.permute.xlu0 %121
  %125 = vset.pattern.permute.xlu0 0
  %126 = vperm.xlu0 %125, %v52
  %v127 = vpop.permute.xlu0 %126
  %130 = vset.pattern.permute.xlu0 0
  %131 = vperm.xlu0 %130, %v53
  %v132 = vpop.permute.xlu0 %131
  %v134 = vld [vmem:[%s3] sm:$0xff]
  %v135 = vld [vmem:[%s3 + $0x8] sm:$0xff]
  %v136 = vld [vmem:[%s3 + $0x10] sm:$0xff]
  %v137 = vld [vmem:[%s3 + $0x18] sm:$0xff]
  %v138 = vld [vmem:[%s3 + $0x20] sm:$0xff]
  %v139 = vld [vmem:[%s3 + $0x28] sm:$0xff]
  %v140 = vld [vmem:[%s3 + $0x30] sm:$0xff]
  %v141 = vld [vmem:[%s3 + $0x38] sm:$0xff]
  %v142 = vld [vmem:[%s3 + $0x40] sm:$0xff]
  %v143 = vld [vmem:[%s3 + $0x48] sm:$0xff]
  %v144 = vld [vmem:[%s3 + $0x50] sm:$0xff]
  %v145 = vld [vmem:[%s3 + $0x58] sm:$0xff]
  %v146 = vld [vmem:[%s3 + $0x60] sm:$0xff]
  %v147 = vld [vmem:[%s3 + $0x68] sm:$0xff]
  %v148 = vld [vmem:[%s3 + $0x70] sm:$0xff]
  %v149 = vld [vmem:[%s3 + $0x78] sm:$0xff]
  %151 = vset.pattern.permute.xlu0 0
  %152 = vperm.xlu0 %151, %v134
  %v153 = vpop.permute.xlu0 %152
  %156 = vset.pattern.permute.xlu0 0
  %157 = vperm.xlu0 %156, %v135
  %v158 = vpop.permute.xlu0 %157
  %161 = vset.pattern.permute.xlu0 0
  %162 = vperm.xlu0 %161, %v136
  %v163 = vpop.permute.xlu0 %162
  %166 = vset.pattern.permute.xlu0 0
  %167 = vperm.xlu0 %166, %v137
  %v168 = vpop.permute.xlu0 %167
  %171 = vset.pattern.permute.xlu0 0
  %172 = vperm.xlu0 %171, %v138
  %v173 = vpop.permute.xlu0 %172
  %176 = vset.pattern.permute.xlu0 0
  %177 = vperm.xlu0 %176, %v139
  %v178 = vpop.permute.xlu0 %177
  %181 = vset.pattern.permute.xlu0 0
  %182 = vperm.xlu0 %181, %v140
  %v183 = vpop.permute.xlu0 %182
  %186 = vset.pattern.permute.xlu0 0
  %187 = vperm.xlu0 %186, %v141
  %v188 = vpop.permute.xlu0 %187
  %191 = vset.pattern.permute.xlu0 0
  %192 = vperm.xlu0 %191, %v142
  %v193 = vpop.permute.xlu0 %192
  %196 = vset.pattern.permute.xlu0 0
  %197 = vperm.xlu0 %196, %v143
  %v198 = vpop.permute.xlu0 %197
  %201 = vset.pattern.permute.xlu0 0
  %202 = vperm.xlu0 %201, %v144
  %v203 = vpop.permute.xlu0 %202
  %206 = vset.pattern.permute.xlu0 0
  %207 = vperm.xlu0 %206, %v145
  %v208 = vpop.permute.xlu0 %207
  %211 = vset.pattern.permute.xlu0 0
  %212 = vperm.xlu0 %211, %v146
  %v213 = vpop.permute.xlu0 %212
  %216 = vset.pattern.permute.xlu0 0
  %217 = vperm.xlu0 %216, %v147
  %v218 = vpop.permute.xlu0 %217
  %221 = vset.pattern.permute.xlu0 0
  %222 = vperm.xlu0 %221, %v148
  %v223 = vpop.permute.xlu0 %222
  %226 = vset.pattern.permute.xlu0 0
  %227 = vperm.xlu0 %226, %v149
  %v228 = vpop.permute.xlu0 %227
  %v230 = vld [vmem:[%s0] sm:$0xff]
  %232 = vst [vmem:[#allocation1] ss:$2 sm:$0xff] %v230
  %v233 = vld.sshfl [vmem:[#allocation1] sm:$0xff pattern:$0x75316420]
  %v234 = vld.sshfl [vmem:[#allocation1 + $0x8] sm:$0xff pattern:$0x75316420]
  %vm235 = vcmask 31744
  %v237 = vsel %vm235, %v21, 0
  %v240 = vsel %vm235, %v22, 0
  %v243 = vsel %vm235, %v23, 0
  %v246 = vsel %vm235, %v24, 0
  %v249 = vsel %vm235, %v25, 0
  %v252 = vsel %vm235, %v26, 0
  %v255 = vsel %vm235, %v27, 0
  %v258 = vsel %vm235, %v28, 0
  %v261 = vsel %vm235, %v29, 0
  %v264 = vsel %vm235, %v30, 0
  %v267 = vsel %vm235, %v31, 0
  %v270 = vsel %vm235, %v32, 0
  %v273 = vsel %vm235, %v33, 0
  %v276 = vsel %vm235, %v34, 0
  %v279 = vsel %vm235, %v35, 0
  %v282 = vsel %vm235, %v36, 0
  %vm284 = vcmask 1043456
  %v285 = vsel %vm284, %v233, 0
  %v287 = vsel %vm284, %v234, 0
  %289 = vmatpush.msra.mxu0 0.0
  %290 = vmatpush.msra.mxu0 0.0
  %291 = vmatpush.msra.mxu0 0.0
  %292 = vmatpush.msra.mxu0 0.0
  %293 = vmatpush.msra.mxu0 0.0
  %294 = vmatpush.msra.mxu0 0.0
  %295 = vmatpush.msra.mxu0 0.0
  %296 = vmatpush.msra.mxu0 0.0
  %297 = vmatpush.msra.mxu0 0.0
  %298 = vmatpush.msra.mxu0 0.0
  %299 = vmatpush.msra.mxu0 0.0
  %300 = vmatpush.msra.mxu0 0.0
  %301 = vmatpush.msra.mxu0 0.0
  %302 = vmatpush.msra.mxu0 0.0
  %303 = vmatpush.msra.mxu0 0.0
  %304 = vmatpush.msra.mxu0 %v285
  %305 = vmatmul.f32.gmra.mxu0 %v237
  %v306 = vpop.f32.mrf.mxu0
  %v307 = vadd.f32 %v57, %v306
  %308 = vmatmul.f32.gmra.mxu0 %v240
  %v309 = vpop.f32.mrf.mxu0
  %v310 = vadd.f32 %v62, %v309
  %311 = vmatmul.f32.gmra.mxu0 %v243
  %v312 = vpop.f32.mrf.mxu0
  %v313 = vadd.f32 %v67, %v312
  %314 = vmatmul.f32.gmra.mxu0 %v246
  %v315 = vpop.f32.mrf.mxu0
  %v316 = vadd.f32 %v72, %v315
  %317 = vmatmul.f32.gmra.mxu0 %v249
  %v318 = vpop.f32.mrf.mxu0
  %v319 = vadd.f32 %v77, %v318
  %320 = vmatmul.f32.gmra.mxu0 %v252
  %v321 = vpop.f32.mrf.mxu0
  %v322 = vadd.f32 %v82, %v321
  %323 = vmatmul.f32.gmra.mxu0 %v255
  %v324 = vpop.f32.mrf.mxu0
  %v325 = vadd.f32 %v87, %v324
  %326 = vmatmul.f32.gmra.mxu0 %v258
  %v327 = vpop.f32.mrf.mxu0
  %v328 = vadd.f32 %v92, %v327
  %329 = vmatmul.f32.gmra.mxu0 %v261
  %v330 = vpop.f32.mrf.mxu0
  %v331 = vadd.f32 %v97, %v330
  %332 = vmatmul.f32.gmra.mxu0 %v264
  %v333 = vpop.f32.mrf.mxu0
  %v334 = vadd.f32 %v102, %v333
  %335 = vmatmul.f32.gmra.mxu0 %v267
  %v336 = vpop.f32.mrf.mxu0
  %v337 = vadd.f32 %v107, %v336
  %338 = vmatmul.f32.gmra.mxu0 %v270
  %v339 = vpop.f32.mrf.mxu0
  %v340 = vadd.f32 %v112, %v339
  %341 = vmatmul.f32.gmra.mxu0 %v273
  %v342 = vpop.f32.mrf.mxu0
  %v343 = vadd.f32 %v117, %v342
  %344 = vmatmul.f32.gmra.mxu0 %v276
  %v345 = vpop.f32.mrf.mxu0
  %v346 = vadd.f32 %v122, %v345
  %347 = vmatmul.f32.gmra.mxu0 %v279
  %v348 = vpop.f32.mrf.mxu0
  %v349 = vadd.f32 %v127, %v348
  %350 = vmatmul.f32.gmra.mxu0 %v282
  %v351 = vpop.f32.mrf.mxu0
  %v352 = vadd.f32 %v132, %v351
  %353 = vdwg.mxu0
  %354 = vmatpush.msra.mxu0 0.0
  %355 = vmatpush.msra.mxu0 0.0
  %356 = vmatpush.msra.mxu0 0.0
  %357 = vmatpush.msra.mxu0 0.0
  %358 = vmatpush.msra.mxu0 0.0
  %359 = vmatpush.msra.mxu0 0.0
  %360 = vmatpush.msra.mxu0 0.0
  %361 = vmatpush.msra.mxu0 0.0
  %362 = vmatpush.msra.mxu0 0.0
  %363 = vmatpush.msra.mxu0 0.0
  %364 = vmatpush.msra.mxu0 0.0
  %365 = vmatpush.msra.mxu0 0.0
  %366 = vmatpush.msra.mxu0 0.0
  %367 = vmatpush.msra.mxu0 0.0
  %368 = vmatpush.msra.mxu0 0.0
  %369 = vmatpush.msra.mxu0 %v287
  %370 = vmatmul.f32.gmra.mxu0 %v237
  %v371 = vpop.f32.mrf.mxu0
  %v372 = vadd.f32 %v57, %v371
  %373 = vmatmul.f32.gmra.mxu0 %v240
  %v374 = vpop.f32.mrf.mxu0
  %v375 = vadd.f32 %v62, %v374
  %376 = vmatmul.f32.gmra.mxu0 %v243
  %v377 = vpop.f32.mrf.mxu0
  %v378 = vadd.f32 %v67, %v377
  %379 = vmatmul.f32.gmra.mxu0 %v246
  %v380 = vpop.f32.mrf.mxu0
  %v381 = vadd.f32 %v72, %v380
  %382 = vmatmul.f32.gmra.mxu0 %v249
  %v383 = vpop.f32.mrf.mxu0
  %v384 = vadd.f32 %v77, %v383
  %385 = vmatmul.f32.gmra.mxu0 %v252
  %v386 = vpop.f32.mrf.mxu0
  %v387 = vadd.f32 %v82, %v386
  %388 = vmatmul.f32.gmra.mxu0 %v255
  %v389 = vpop.f32.mrf.mxu0
  %v390 = vadd.f32 %v87, %v389
  %391 = vmatmul.f32.gmra.mxu0 %v258
  %v392 = vpop.f32.mrf.mxu0
  %v393 = vadd.f32 %v92, %v392
  %394 = vmatmul.f32.gmra.mxu0 %v261
  %v395 = vpop.f32.mrf.mxu0
  %v396 = vadd.f32 %v97, %v395
  %397 = vmatmul.f32.gmra.mxu0 %v264
  %v398 = vpop.f32.mrf.mxu0
  %v399 = vadd.f32 %v102, %v398
  %400 = vmatmul.f32.gmra.mxu0 %v267
  %v401 = vpop.f32.mrf.mxu0
  %v402 = vadd.f32 %v107, %v401
  %403 = vmatmul.f32.gmra.mxu0 %v270
  %v404 = vpop.f32.mrf.mxu0
  %v405 = vadd.f32 %v112, %v404
  %406 = vmatmul.f32.gmra.mxu0 %v273
  %v407 = vpop.f32.mrf.mxu0
  %v408 = vadd.f32 %v117, %v407
  %409 = vmatmul.f32.gmra.mxu0 %v276
  %v410 = vpop.f32.mrf.mxu0
  %v411 = vadd.f32 %v122, %v410
  %412 = vmatmul.f32.gmra.mxu0 %v279
  %v413 = vpop.f32.mrf.mxu0
  %v414 = vadd.f32 %v127, %v413
  %415 = vmatmul.f32.gmra.mxu0 %v282
  %v416 = vpop.f32.mrf.mxu0
  %v417 = vadd.f32 %v132, %v416
  %418 = vdwg.mxu0
  %v419 = vmax.f32 %v307, 0.0
  %v420 = vmax.f32 %v372, 0.0
  %v421 = vmax.f32 %v310, 0.0
  %v422 = vmax.f32 %v375, 0.0
  %v423 = vmax.f32 %v313, 0.0
  %v424 = vmax.f32 %v378, 0.0
  %v425 = vmax.f32 %v316, 0.0
  %v426 = vmax.f32 %v381, 0.0
  %v427 = vmax.f32 %v319, 0.0
  %v428 = vmax.f32 %v384, 0.0
  %v429 = vmax.f32 %v322, 0.0
  %v430 = vmax.f32 %v387, 0.0
  %v431 = vmax.f32 %v325, 0.0
  %v432 = vmax.f32 %v390, 0.0
  %v433 = vmax.f32 %v328, 0.0
  %v434 = vmax.f32 %v393, 0.0
  %v435 = vmax.f32 %v331, 0.0
  %v436 = vmax.f32 %v396, 0.0
  %v437 = vmax.f32 %v334, 0.0
  %v438 = vmax.f32 %v399, 0.0
  %v439 = vmax.f32 %v337, 0.0
  %v440 = vmax.f32 %v402, 0.0
  %v441 = vmax.f32 %v340, 0.0
  %v442 = vmax.f32 %v405, 0.0
  %v443 = vmax.f32 %v343, 0.0
  %v444 = vmax.f32 %v408, 0.0
  %v445 = vmax.f32 %v346, 0.0
  %v446 = vmax.f32 %v411, 0.0
  %v447 = vmax.f32 %v349, 0.0
  %v448 = vmax.f32 %v414, 0.0
  %v449 = vmax.f32 %v352, 0.0
  %v450 = vmax.f32 %v417, 0.0
  %v451 = vmul.f32 %v419, %v153
  %v452 = vmul.f32 %v420, %v153
  %v453 = vmul.f32 %v421, %v158
  %v454 = vmul.f32 %v422, %v158
  %v455 = vmul.f32 %v423, %v163
  %v456 = vmul.f32 %v424, %v163
  %v457 = vmul.f32 %v425, %v168
  %v458 = vmul.f32 %v426, %v168
  %v459 = vmul.f32 %v427, %v173
  %v460 = vmul.f32 %v428, %v173
  %v461 = vmul.f32 %v429, %v178
  %v462 = vmul.f32 %v430, %v178
  %v463 = vmul.f32 %v431, %v183
  %v464 = vmul.f32 %v432, %v183
  %v465 = vmul.f32 %v433, %v188
  %v466 = vmul.f32 %v434, %v188
  %v467 = vmul.f32 %v435, %v193
  %v468 = vmul.f32 %v436, %v193
  %v469 = vmul.f32 %v437, %v198
  %v470 = vmul.f32 %v438, %v198
  %v471 = vmul.f32 %v439, %v203
  %v472 = vmul.f32 %v440, %v203
  %v473 = vmul.f32 %v441, %v208
  %v474 = vmul.f32 %v442, %v208
  %v475 = vmul.f32 %v443, %v213
  %v476 = vmul.f32 %v444, %v213
  %v477 = vmul.f32 %v445, %v218
  %v478 = vmul.f32 %v446, %v218
  %v479 = vmul.f32 %v447, %v223
  %v480 = vmul.f32 %v448, %v223
  %v481 = vmul.f32 %v449, %v228
  %v482 = vmul.f32 %v450, %v228
  %v483 = vadd.f32 %v451, %v453
  %v484 = vadd.f32 %v483, %v455
  %v485 = vadd.f32 %v484, %v457
  %v486 = vadd.f32 %v485, %v459
  %v487 = vadd.f32 %v486, %v461
  %v488 = vadd.f32 %v487, %v463
  %v489 = vadd.f32 %v488, %v465
  %v490 = vadd.f32 %v489, %v467
  %v491 = vadd.f32 %v490, %v469
  %v492 = vadd.f32 %v491, %v471
  %v493 = vadd.f32 %v492, %v473
  %v494 = vadd.f32 %v493, %v475
  %v495 = vadd.f32 %v494, %v477
  %v496 = vadd.f32 %v495, %v479
  %v497 = vadd.f32 %v496, %v481
  %v498 = vrot.slane %v497, 4
  %v499 = vadd.f32 %v497, %v498
  %v500 = vrot.slane %v499, 2
  %v501 = vadd.f32 %v499, %v500
  %v502 = vrot.slane %v501, 1
  %v503 = vadd.f32 %v501, %v502
  %v504 = vadd.f32 %v452, %v454
  %v505 = vadd.f32 %v504, %v456
  %v506 = vadd.f32 %v505, %v458
  %v507 = vadd.f32 %v506, %v460
  %v508 = vadd.f32 %v507, %v462
  %v509 = vadd.f32 %v508, %v464
  %v510 = vadd.f32 %v509, %v466
  %v511 = vadd.f32 %v510, %v468
  %v512 = vadd.f32 %v511, %v470
  %v513 = vadd.f32 %v512, %v472
  %v514 = vadd.f32 %v513, %v474
  %v515 = vadd.f32 %v514, %v476
  %v516 = vadd.f32 %v515, %v478
  %v517 = vadd.f32 %v516, %v480
  %v518 = vadd.f32 %v517, %v482
  %v519 = vrot.slane %v518, 4
  %v520 = vadd.f32 %v518, %v519
  %v521 = vrot.slane %v520, 2
  %v522 = vadd.f32 %v520, %v521
  %v523 = vrot.slane %v522, 1
  %v524 = vadd.f32 %v522, %v523
  %v525 = vstv %s37
  %v526 = vadd.f32 %v503, %v525
  %v527 = vadd.f32 %v524, %v525
  %v530 = vrot.slane %v527, 7
  %vm531 = vcmask 1040384
  %v532 = vsel %vm531, %v526, %v530
  %v534 = vlaneseq
  %vm535 = vcmp.ge.s32.totalorder %v534, 0
  %vm536 = vcmp.lt.s32.totalorder %v534, 256
  %vm537 = vmand %vm535, %vm536
  %538 = vst.msk [vmem:[%s5] sm:$0x3] %vm537, %v532
  // Predicated region
  $region22: #{value_network_forward.1} parent=0 // pred_check
    _
  $region23: #{value_network_forward.1} parent=0 // pred_check_branch
    %540 = sbr.rel (0) target = $region25
  $region24: #{value_network_forward.1} parent=0 // pred_region
    _
  $region25: #{value_network_forward.1} parent=0 // pred_fallthru
    _
  // Predicated region
  $region26: #{value_network_forward.1} parent=0 // pred_check
    _
  $region27: #{value_network_forward.1} parent=0 // pred_check_branch
    %542 = sbr.rel (0) target = $region29
  $region28: #{value_network_forward.1} parent=0 // pred_region
    _
  $region29: #{value_network_forward.1} parent=0 // pred_fallthru
    _

</llo_original>
